<compile_context>
chip_gen: v6e
topology: v6e:2x2x1
jax: 0.10.0
libtpu: 0.0.40
codegen_flags: <defaults>
</compile_context>

<pallas_src>
import functools

import jax
import jax.numpy as jnp
from jax import lax
from jax.experimental import pallas as pl
from jax.experimental.pallas import tpu as pltpu

BN_EPS = 1e-5
NEG_SLOPE = 0.2            # nn.LeakyReLU(0.2) / F.leaky_relu(..., 0.2)
DILATIONS = (8, 4, 2)      # dilated_conv_block1 / 2 / 3 in the PyTorch module


def _bn_scale_shift(bias, bn, cout):
    """Fold inference-mode BatchNorm1d into per-channel scale / shift."""
    if bn is None:
        return jnp.ones((cout,), jnp.float32), bias.astype(jnp.float32)
    scale = bn["gamma"] / jnp.sqrt(bn["var"] + BN_EPS)
    shift = (bias - bn["mean"]) * scale + bn["beta"]
    return scale, shift


# ------------------------------ Pallas kernels ------------------------------

def _dec_conv_kernel(enc_ref, up_ref, w_ref, sh_ref, o_ref, *, k_taps, dl,
                     neg_slope):
    """skip-concat + Conv1d(K, dilation 1, 'same') + folded BN + LeakyReLU.

    Channels on sublanes, length on lanes.  The K taps are folded into a
    single matmul by stacking the K shifted lane-windows of the concatenated
    (enc, up) features along the contraction axis."""
    l = o_ref.shape[-1]
    feat = jnp.concatenate([enc_ref[...], up_ref[...]], axis=0)        # (Cin, L)
    cin = feat.shape[0]
    dr = k_taps - 1 - dl
    pieces = []
    if dl:
        pieces.append(jnp.zeros((cin, dl), jnp.float32))
    pieces.append(feat)
    if dr:
        pieces.append(jnp.zeros((cin, dr), jnp.float32))
    featp = jnp.concatenate(pieces, axis=1) if len(pieces) > 1 else feat
    stack = jnp.concatenate([featp[:, k:k + l] for k in range(k_taps)], axis=0)
    h = jnp.dot(w_ref[...], stack, preferred_element_type=jnp.float32)
    h = h + sh_ref[...]
    o_ref[...] = jnp.where(h >= 0.0, h, neg_slope * h).astype(o_ref.dtype)


def _inception_kernel(h_ref, wp_ref, sp_ref, w2_ref, s2_ref, o_ref, *, k_taps,
                      dils, cb, neg_slope):
    """One fused DilatedResidualInceptionBlock:
       * one matmul for all four 1x1 convs (3 dilated branches + simple), BN folded
       * LeakyReLU(0.2) only on the dilated branches' 1x1 outputs
       * one block-diagonal matmul for the 3 dilated K-tap convs (taps stacked on
         the contraction axis) with identity columns passing the simple branch
         through -> the channel concat comes out of the matmul for free
       * residual add + LeakyReLU epilogue."""
    x = h_ref[...]                                                     # (C, L) f32
    c, l = x.shape
    nb = len(dils)

    pw = jnp.dot(wp_ref[...], x, preferred_element_type=jnp.float32) + sp_ref[...]
    row = lax.broadcasted_iota(jnp.int32, pw.shape, 0)
    act = jnp.where(row < nb * cb, jnp.where(pw >= 0.0, pw, neg_slope * pw), pw)

    lefts = [d * (k_taps - 1) // 2 for d in dils]        # torch 'same': left = total//2
    rights = [d * (k_taps - 1) - lf for d, lf in zip(dils, lefts)]
    ml, mr = max(lefts), max(rights)
    pieces = []
    if ml:
        pieces.append(jnp.zeros((c, ml), jnp.float32))
    pieces.append(act)
    if mr:
        pieces.append(jnp.zeros((c, mr), jnp.float32))
    actp = jnp.concatenate(pieces, axis=1) if len(pieces) > 1 else act

    ops = []
    for b, (d, lf) in enumerate(zip(dils, lefts)):
        hb = actp[b * cb:(b + 1) * cb, :]
        for k in range(k_taps):
            off = ml - lf + k * d                        # static lane offset
            ops.append(hb[:, off:off + l])
    ops.append(act[nb * cb:, :])                         # simple branch passthrough
    stack = jnp.concatenate(ops, axis=0)                 # (nb*K*cb + cb, L)

    z = jnp.dot(w2_ref[...], stack, preferred_element_type=jnp.float32) + s2_ref[...]
    z = z + x                                            # residual
    o_ref[...] = jnp.where(z >= 0.0, z, neg_slope * z).astype(o_ref.dtype)


# ----------------------------- Pallas wrappers -------------------------------

def dec_conv_bn_lrelu(enc, up, weight, bias, bn, *, neg_slope=NEG_SLOPE):
    """x = LeakyReLU(BN(Conv1d(cat([enc, up], dim=channels))))  (kernel A)."""
    n, c_enc, l = enc.shape
    _, c_up, _ = up.shape
    oc, ic, k = weight.shape
    assert ic == c_enc + c_up
    scale, shift = _bn_scale_shift(bias, bn, oc)
    # stacked weight: [o, k*ic + c] = weight[o, c, k] * scale[o]
    w_stack = jnp.transpose(weight * scale[:, None, None], (0, 2, 1)).reshape(oc, k * ic)
    w_stack = w_stack.astype(jnp.float32)
    shift = shift.reshape(oc, 1).astype(jnp.float32)
    dl = (k - 1) // 2            # PyTorch padding='same', dilation 1: left = total//2

    return pl.pallas_call(
        functools.partial(_dec_conv_kernel, k_taps=k, dl=dl, neg_slope=neg_slope),
        out_shape=jax.ShapeDtypeStruct((n, oc, l), jnp.float32),
        grid=(n,),
        in_specs=[
            pl.BlockSpec((None, c_enc, l), lambda i: (i, 0, 0)),
            pl.BlockSpec((None, c_up, l), lambda i: (i, 0, 0)),
            pl.BlockSpec((oc, k * ic), lambda i: (0, 0)),
            pl.BlockSpec((oc, 1), lambda i: (0, 0)),
        ],
        out_specs=pl.BlockSpec((None, oc, l), lambda i: (i, 0, 0)),
        compiler_params=pltpu.CompilerParams(dimension_semantics=("parallel",)),
    )(enc, up, w_stack, shift)


def inception_block(h, blk, *, k_taps, neg_slope=NEG_SLOPE):
    """One DilatedResidualInceptionBlock as a single fused pallas_call."""
    n, oc, l = h.shape
    cb = oc // 4
    nb = len(DILATIONS)

    # fused 1x1 weights (rows = [d8 branch | d4 | d2 | simple]) with BN folded
    wp_rows, sp_rows = [], []
    for br in blk["dilated"]:
        sc, sh = _bn_scale_shift(br["b1"], br["bn1"], cb)
        wp_rows.append(br["w1"][:, :, 0] * sc[:, None])
        sp_rows.append(sh)
    sc, sh = _bn_scale_shift(blk["simple"]["b"], blk["simple"]["bn"], cb)
    wp_rows.append(blk["simple"]["w"][:, :, 0] * sc[:, None])
    sp_rows.append(sh)
    wp = jnp.concatenate(wp_rows, axis=0).astype(jnp.float32)          # (OC, OC)
    sp = jnp.concatenate(sp_rows).reshape(oc, 1).astype(jnp.float32)

    # block-diagonal dilated K-tap conv weights (BN2 folded) + identity passthrough
    ncol = nb * k_taps * cb + cb
    w2 = jnp.zeros((oc, ncol), jnp.float32)
    s2 = jnp.zeros((oc,), jnp.float32)
    for b, br in enumerate(blk["dilated"]):
        sc2, sh2 = _bn_scale_shift(br["b2"], br["bn2"], cb)
        blkw = jnp.transpose(br["w2"] * sc2[:, None, None], (0, 2, 1)).reshape(cb, k_taps * cb)
        w2 = w2.at[b * cb:(b + 1) * cb, b * k_taps * cb:(b + 1) * k_taps * cb].set(blkw)
        s2 = s2.at[b * cb:(b + 1) * cb].set(sh2)
    w2 = w2.at[nb * cb:, nb * k_taps * cb:].set(jnp.eye(cb, dtype=jnp.float32))
    s2 = s2.reshape(oc, 1)

    return pl.pallas_call(
        functools.partial(_inception_kernel, k_taps=k_taps, dils=DILATIONS,
                          cb=cb, neg_slope=neg_slope),
        out_shape=jax.ShapeDtypeStruct((n, oc, l), jnp.float32),
        grid=(n,),
        in_specs=[
            pl.BlockSpec((None, oc, l), lambda i: (i, 0, 0)),
            pl.BlockSpec((oc, oc), lambda i: (0, 0)),
            pl.BlockSpec((oc, 1), lambda i: (0, 0)),
            pl.BlockSpec((oc, ncol), lambda i: (0, 0)),
            pl.BlockSpec((oc, 1), lambda i: (0, 0)),
        ],
        out_specs=pl.BlockSpec((None, oc, l), lambda i: (i, 0, 0)),
        compiler_params=pltpu.CompilerParams(dimension_semantics=("parallel",)),
    )(h, wp, sp, w2, s2)


# --------------------------- polyphase upsample ------------------------------

def _shift_cols(x, shift, m):
    """y[..., i] = x[..., i + shift] if 0 <= i + shift < L else 0, with m cols."""
    l = x.shape[-1]
    lo = max(0, -shift)
    hi = min(m, l - shift)
    if hi <= lo:
        return jnp.zeros(x.shape[:-1] + (m,), x.dtype)
    seg = x[..., lo + shift:hi + shift]
    return jnp.pad(seg, ((0, 0), (0, 0), (lo, m - hi)))


def conv_transpose1d_polyphase(x, w_t, b, *, stride, padding, output_padding):
    """PyTorch ConvTranspose1d (weight (Cin, Cout, K)) via polyphase decomposition:
    s tiny per-phase matmuls + a phase interleave.  No zero-stuffed buffer, no
    structural-zero FLOPs.  Host-side XLA glue feeding Pallas kernel A.
    # TODO(synk): fold into kernel A (phase-decomposed) to remove the HBM
    # round trip of `up` for long sequences."""
    n, cin, l_in = x.shape
    _, cout, k = w_t.shape
    s, p = stride, padding
    l_out = (l_in - 1) * s - 2 * p + k + output_padding
    m = -(-l_out // s)
    phases = []
    for a in range(s):                       # output positions t with t % s == a
        r = (a + p) % s
        u0 = (a + p) // s
        acc = jnp.zeros((n, cout, m), jnp.float32)
        for j, kk in enumerate(range(r, k, s)):
            xs = _shift_cols(x, u0 - j, m)
            acc = acc + jnp.einsum("ncm,cd->ndm", xs, w_t[:, :, kk],
                                   precision=lax.Precision.HIGHEST)
        phases.append(acc)
    up = jnp.stack(phases, axis=-1).reshape(n, cout, m * s)[:, :, :l_out]
    return up + b.reshape(1, cout, 1)


# ------------------------------ parameters ----------------------------------

class _KeyGen:
    def __init__(self, key):
        self._key = key

    def __call__(self):
        self._key, sub = jax.random.split(self._key)
        return sub


def _init_bn(kg, c):
    return dict(
        gamma=1.0 + 0.1 * jax.random.normal(kg(), (c,), jnp.float32),
        beta=0.1 * jax.random.normal(kg(), (c,), jnp.float32),
        mean=0.1 * jax.random.normal(kg(), (c,), jnp.float32),
        var=1.0 + 0.2 * jnp.abs(jax.random.normal(kg(), (c,), jnp.float32)),
    )


def _init_conv(kg, cout, cin, k):
    bound = 1.0 / ((cin * k) ** 0.5)
    w = jax.random.uniform(kg(), (cout, cin, k), jnp.float32, -bound, bound)
    b = jax.random.uniform(kg(), (cout,), jnp.float32, -bound, bound)
    return w, b


def init_decoder_block_params(key, in_chans, out_chans, kernel_size, layers):
    kg = _KeyGen(key)
    p = {}
    # upsample: ConvTranspose1d(in_chans, in_chans//2, k, stride=sampling)
    bound = 1.0 / ((in_chans * kernel_size) ** 0.5)
    p["up"] = (
        jax.random.uniform(kg(), (in_chans, in_chans // 2, kernel_size),
                           jnp.float32, -bound, bound),
        jax.random.uniform(kg(), (in_chans // 2,), jnp.float32, -bound, bound),
    )
    chans_after = in_chans   # skip_connection=True, expected_skip_connection_chans=None
    p["dec_conv"] = _init_conv(kg, out_chans, chans_after, kernel_size)
    p["dec_bn"] = _init_bn(kg, out_chans)
    cb = out_chans // 4
    inception = []
    for _ in range(layers):
        blk = {"dilated": [], "simple": None}
        for _d in DILATIONS:
            w1, b1 = _init_conv(kg, cb, out_chans, 1)
            w2, b2 = _init_conv(kg, cb, cb, kernel_size)
            blk["dilated"].append(dict(w1=w1, b1=b1, bn1=_init_bn(kg, cb),
                                       w2=w2, b2=b2, bn2=_init_bn(kg, cb)))
        ws, bs = _init_conv(kg, cb, out_chans, 1)
        blk["simple"] = dict(w=ws, b=bs, bn=_init_bn(kg, cb))
        inception.append(blk)
    p["inception"] = inception
    return p


# -------------------------------- forward -----------------------------------

def _upsample_padding(kernel_size, sampling_factor):
    k, s = kernel_size, sampling_factor
    if k == s:
        return 0, 0
    if (k - s) % 2 == 0:
        return (k - s) // 2, 0
    out_pad = 1
    return (k - s + out_pad) // 2, out_pad


def decoder_block_forward(params, x_ncl, enc_ncl, *, kernel_size=4, sampling_factor=2):
    x = x_ncl.astype(jnp.float32)                       # NCL kept end to end
    enc = enc_ncl.astype(jnp.float32)
    pad, out_pad = _upsample_padding(kernel_size, sampling_factor)

    up_w, up_b = params["up"]
    up = conv_transpose1d_polyphase(x, up_w, up_b, stride=sampling_factor,
                                    padding=pad, output_padding=out_pad)
    assert enc.shape[-1] == up.shape[-1], (enc.shape, up.shape)

    # skip-concat + Conv1d + BN + LeakyReLU (fused kernel A)
    dw, db = params["dec_conv"]
    h = dec_conv_bn_lrelu(enc, up, dw, db, params["dec_bn"])

    # DilatedResidualInceptionBlock(s) (fused kernel B, one call per layer)
    for blk in params["inception"]:
        h = inception_block(h, blk, k_taps=kernel_size)

    # TODO(synk): nn.Dropout1d is not instantiated for dropout=0.0; omitted.
    return h                                            # NCL


# ----------------------- pure-JAX reference (lax.conv) -----------------------

def _ref_conv1d_same(x, w, b, dilation=1):
    k = w.shape[-1]
    total = dilation * (k - 1)
    left = total // 2                                   # torch 'same': extra pad right
    y = lax.conv_general_dilated(
        x, w, window_strides=(1,), padding=[(left, total - left)],
        rhs_dilation=(dilation,), dimension_numbers=("NCH", "OIH", "NCH"),
        precision=lax.Precision.HIGHEST)
    return y + b.reshape(1, -1, 1)


def _ref_conv_transpose1d(x, w, b, *, stride, padding, output_padding):
    _, _, k = w.shape
    w_f = jnp.transpose(w, (1, 0, 2))[:, :, ::-1]
    y = lax.conv_general_dilated(
        x, w_f, window_strides=(1,),
        padding=[(k - 1 - padding, k - 1 - padding + output_padding)],
        lhs_dilation=(stride,), dimension_numbers=("NCH", "OIH", "NCH"),
        precision=lax.Precision.HIGHEST)
    return y + b.reshape(1, -1, 1)


def _ref_bn(x, bn):
    scale = (bn["gamma"] / jnp.sqrt(bn["var"] + BN_EPS)).reshape(1, -1, 1)
    return (x - bn["mean"].reshape(1, -1, 1)) * scale + bn["beta"].reshape(1, -1, 1)


def _ref_leaky(x):
    return jnp.where(x >= 0.0, x, NEG_SLOPE * x)


def decoder_block_reference(params, x, enc, *, kernel_size=4, sampling_factor=2):
    pad, out_pad = _upsample_padding(kernel_size, sampling_factor)
    up_w, up_b = params["up"]
    up = _ref_conv_transpose1d(x, up_w, up_b, stride=sampling_factor,
                               padding=pad, output_padding=out_pad)
    h = jnp.concatenate([enc, up], axis=1)
    dw, db = params["dec_conv"]
    h = _ref_leaky(_ref_bn(_ref_conv1d_same(h, dw, db, 1), params["dec_bn"]))
    for blk in params["inception"]:
        branches = []
        for br, d in zip(blk["dilated"], DILATIONS):
            t = _ref_leaky(_ref_bn(_ref_conv1d_same(h, br["w1"], br["b1"], 1), br["bn1"]))
            t = _ref_bn(_ref_conv1d_same(t, br["w2"], br["b2"], d), br["bn2"])
            branches.append(t)
        sb = _ref_bn(_ref_conv1d_same(h, blk["simple"]["w"], blk["simple"]["b"], 1),
                     blk["simple"]["bn"])
        branches.append(sb)
        h = _ref_leaky(jnp.concatenate(branches, axis=1) + h)
    return h


# --------------------------------- main --------------------------------------

if __name__ == "__main__":
    key = jax.random.PRNGKey(0)
    kp, kx, ke = jax.random.split(key, 3)

    in_chans, out_chans = 8, 8
    kernel_size, sampling_factor, layers = 4, 2, 1
    N, L = 2, 64

    params = init_decoder_block_params(kp, in_chans, out_chans, kernel_size, layers)
    x = jax.random.normal(kx, (N, in_chans, L), jnp.float32)                    # NCL
    enc_features = jax.random.normal(ke, (N, in_chans // 2, L * sampling_factor),
                                     jnp.float32)                               # NCL

    fwd = jax.jit(functools.partial(decoder_block_forward,
                                    kernel_size=kernel_size,
                                    sampling_factor=sampling_factor))
    y = fwd(params, x, enc_features)
    jax.block_until_ready(y)
    assert y.shape == (N, out_chans, L * sampling_factor), y.shape
    assert bool(jnp.all(jnp.isfinite(y)))

    # correctness check against a pure-JAX (lax.conv) reference of the forward
    y_ref = decoder_block_reference(params, x, enc_features,
                                    kernel_size=kernel_size,
                                    sampling_factor=sampling_factor)
    num = jnp.sqrt(jnp.mean((y - y_ref) ** 2))
    den = jnp.sqrt(jnp.mean(y_ref ** 2)) + 1e-6
    rel = float(num / den)
    assert rel < 2e-2, f"relative RMS error too large: {rel}"

    print("KERNEL_OK")
</pallas_src>

<mosaic_0001>
module attributes {stable_mosaic.version = 11 : i64} {
  func.func @_dec_conv_kernel(%arg0: i32, %arg1: memref<1x4x128xf32, #tpu.memory_space<vmem>>, %arg2: memref<1x4x128xf32, #tpu.memory_space<vmem>>, %arg3: memref<8x32xf32, #tpu.memory_space<vmem>>, %arg4: memref<8x1xf32, #tpu.memory_space<vmem>>, %arg5: memref<1x8x128xf32, #tpu.memory_space<vmem>>) attributes {dimension_semantics = [#tpu.dimension_semantics<parallel>], iteration_bounds = array<i64: 2>, scalar_prefetch = 0 : i64, scratch_operands = 0 : i64, tpu.core_type = #tpu.core_type<tc>, window_params = [{transform_indices = @transform_0, window_bounds = array<i64: 1, 4, 128>}, {transform_indices = @transform_1, window_bounds = array<i64: 1, 4, 128>}, {pipeline_mode = #tpu.pipeline_mode<synchronous>, transform_indices = @transform_2, window_bounds = array<i64: 8, 32>}, {pipeline_mode = #tpu.pipeline_mode<synchronous>, transform_indices = @transform_3, window_bounds = array<i64: 8, 1>}, {transform_indices = @transform_4, window_bounds = array<i64: 1, 8, 128>}]} {
    %c0 = arith.constant 0 : index
    %c0_0 = arith.constant 0 : index
    %c0_1 = arith.constant 0 : index
    %0 = vector.load %arg1[%c0, %c0_0, %c0_1] : memref<1x4x128xf32, #tpu.memory_space<vmem>>, vector<1x4x128xf32>
    %1 = vector.shape_cast %0 : vector<1x4x128xf32> to vector<4x128xf32>
    %c0_2 = arith.constant 0 : index
    %c0_3 = arith.constant 0 : index
    %c0_4 = arith.constant 0 : index
    %2 = vector.load %arg2[%c0_2, %c0_3, %c0_4] : memref<1x4x128xf32, #tpu.memory_space<vmem>>, vector<1x4x128xf32>
    %3 = vector.shape_cast %2 : vector<1x4x128xf32> to vector<4x128xf32>
    %4 = tpu.concatenate %1, %3 in 0 : vector<4x128xf32>, vector<4x128xf32> -> vector<8x128xf32>
    %cst = arith.constant 0.000000e+00 : f32
    %5 = vector.broadcast %cst : f32 to vector<8x1xf32>
    %cst_5 = arith.constant 0.000000e+00 : f32
    %6 = vector.broadcast %cst_5 : f32 to vector<8x2xf32>
    %7 = tpu.concatenate %5, %4, %6 in 1 : vector<8x1xf32>, vector<8x128xf32>, vector<8x2xf32> -> vector<8x131xf32>
    %8 = vector.extract_strided_slice %7 {offsets = [0, 0], sizes = [8, 128], strides = [1, 1]} : vector<8x131xf32> to vector<8x128xf32>
    %9 = vector.extract_strided_slice %7 {offsets = [0, 1], sizes = [8, 128], strides = [1, 1]} : vector<8x131xf32> to vector<8x128xf32>
    %10 = vector.extract_strided_slice %7 {offsets = [0, 2], sizes = [8, 128], strides = [1, 1]} : vector<8x131xf32> to vector<8x128xf32>
    %11 = vector.extract_strided_slice %7 {offsets = [0, 3], sizes = [8, 128], strides = [1, 1]} : vector<8x131xf32> to vector<8x128xf32>
    %12 = tpu.concatenate %8, %9, %10, %11 in 0 : vector<8x128xf32>, vector<8x128xf32>, vector<8x128xf32>, vector<8x128xf32> -> vector<32x128xf32>
    %c0_6 = arith.constant 0 : index
    %c0_7 = arith.constant 0 : index
    %13 = vector.load %arg3[%c0_6, %c0_7] : memref<8x32xf32, #tpu.memory_space<vmem>>, vector<8x32xf32>
    %cst_8 = arith.constant dense<0.000000e+00> : vector<8x128xf32>
    %14 = tpu.matmul %13, %12, %cst_8 {dimension_numbers = #tpu.dot_dimension_numbers<[1], [0], [0], [1], [0, 0, 1, 1], [], []>} : vector<8x32xf32>, vector<32x128xf32>, vector<8x128xf32> -> vector<8x128xf32>
    %c0_9 = arith.constant 0 : index
    %c0_10 = arith.constant 0 : index
    %15 = vector.load %arg4[%c0_9, %c0_10] : memref<8x1xf32, #tpu.memory_space<vmem>>, vector<8x1xf32>
    %16 = vector.broadcast %15 : vector<8x1xf32> to vector<8x128xf32>
    %17 = arith.addf %14, %16 : vector<8x128xf32>
    %cst_11 = arith.constant 0.000000e+00 : f32
    %18 = vector.broadcast %cst_11 : f32 to vector<8x128xf32>
    %19 = arith.cmpf oge, %17, %18 : vector<8x128xf32>
    %cst_12 = arith.constant 2.000000e-01 : f32
    %20 = vector.broadcast %cst_12 : f32 to vector<8x128xf32>
    %21 = arith.mulf %20, %17 : vector<8x128xf32>
    %22 = arith.select %19, %17, %21 : vector<8x128xi1>, vector<8x128xf32>
    %c0_13 = arith.constant 0 : index
    %c0_14 = arith.constant 0 : index
    %c0_15 = arith.constant 0 : index
    %23 = vector.load %arg5[%c0_13, %c0_14, %c0_15] : memref<1x8x128xf32, #tpu.memory_space<vmem>>, vector<1x8x128xf32>
    %24 = vector.shape_cast %23 : vector<1x8x128xf32> to vector<8x128xf32>
    %25 = vector.shape_cast %22 : vector<8x128xf32> to vector<1x8x128xf32>
    tpu.vector_store %arg5[%c0_13, %c0_14, %c0_15], %25 {strides = array<i32>} : memref<1x8x128xf32, #tpu.memory_space<vmem>>, vector<1x8x128xf32>,
    return
  }
  func.func @transform_0(%arg0: i32) -> (i32, i32, i32) {
    %c0_i32 = arith.constant 0 : i32
    %c0_i32_0 = arith.constant 0 : i32
    %c0_i32_1 = arith.constant 0 : i32
    return %arg0, %c0_i32, %c0_i32_0 : i32, i32, i32
  }
  func.func @transform_1(%arg0: i32) -> (i32, i32, i32) {
    %c0_i32 = arith.constant 0 : i32
    %c0_i32_0 = arith.constant 0 : i32
    %c0_i32_1 = arith.constant 0 : i32
    return %arg0, %c0_i32, %c0_i32_0 : i32, i32, i32
  }
  func.func @transform_2(%arg0: i32) -> (i32, i32) {
    %c0_i32 = arith.constant 0 : i32
    %c0_i32_0 = arith.constant 0 : i32
    %c0_i32_1 = arith.constant 0 : i32
    return %c0_i32, %c0_i32_0 : i32, i32
  }
  func.func @transform_3(%arg0: i32) -> (i32, i32) {
    %c0_i32 = arith.constant 0 : i32
    %c0_i32_0 = arith.constant 0 : i32
    %c0_i32_1 = arith.constant 0 : i32
    return %c0_i32, %c0_i32_0 : i32, i32
  }
  func.func @transform_4(%arg0: i32) -> (i32, i32, i32) {
    %c0_i32 = arith.constant 0 : i32
    %c0_i32_0 = arith.constant 0 : i32
    %c0_i32_1 = arith.constant 0 : i32
    return %arg0, %c0_i32, %c0_i32_0 : i32, i32, i32
  }
}

module attributes {stable_mosaic.version = 11 : i64} {
  func.func @_inception_kernel(%arg0: i32, %arg1: memref<1x8x128xf32, #tpu.memory_space<vmem>>, %arg2: memref<8x8xf32, #tpu.memory_space<vmem>>, %arg3: memref<8x1xf32, #tpu.memory_space<vmem>>, %arg4: memref<8x26xf32, #tpu.memory_space<vmem>>, %arg5: memref<8x1xf32, #tpu.memory_space<vmem>>, %arg6: memref<1x8x128xf32, #tpu.memory_space<vmem>>) attributes {dimension_semantics = [#tpu.dimension_semantics<parallel>], iteration_bounds = array<i64: 2>, scalar_prefetch = 0 : i64, scratch_operands = 0 : i64, tpu.core_type = #tpu.core_type<tc>, window_params = [{transform_indices = @transform_0, window_bounds = array<i64: 1, 8, 128>}, {pipeline_mode = #tpu.pipeline_mode<synchronous>, transform_indices = @transform_1, window_bounds = array<i64: 8, 8>}, {pipeline_mode = #tpu.pipeline_mode<synchronous>, transform_indices = @transform_2, window_bounds = array<i64: 8, 1>}, {pipeline_mode = #tpu.pipeline_mode<synchronous>, transform_indices = @transform_3, window_bounds = array<i64: 8, 26>}, {pipeline_mode = #tpu.pipeline_mode<synchronous>, transform_indices = @transform_4, window_bounds = array<i64: 8, 1>}, {transform_indices = @transform_5, window_bounds = array<i64: 1, 8, 128>}]} {
    %c0 = arith.constant 0 : index
    %c0_0 = arith.constant 0 : index
    %c0_1 = arith.constant 0 : index
    %0 = vector.load %arg1[%c0, %c0_0, %c0_1] : memref<1x8x128xf32, #tpu.memory_space<vmem>>, vector<1x8x128xf32>
    %1 = vector.shape_cast %0 : vector<1x8x128xf32> to vector<8x128xf32>
    %c0_2 = arith.constant 0 : index
    %c0_3 = arith.constant 0 : index
    %2 = vector.load %arg2[%c0_2, %c0_3] : memref<8x8xf32, #tpu.memory_space<vmem>>, vector<8x8xf32>
    %cst = arith.constant dense<0.000000e+00> : vector<8x128xf32>
    %3 = tpu.matmul %2, %1, %cst {dimension_numbers = #tpu.dot_dimension_numbers<[1], [0], [0], [1], [0, 0, 1, 1], [], []>} : vector<8x8xf32>, vector<8x128xf32>, vector<8x128xf32> -> vector<8x128xf32>
    %c0_4 = arith.constant 0 : index
    %c0_5 = arith.constant 0 : index
    %4 = vector.load %arg3[%c0_4, %c0_5] : memref<8x1xf32, #tpu.memory_space<vmem>>, vector<8x1xf32>
    %5 = vector.broadcast %4 : vector<8x1xf32> to vector<8x128xf32>
    %6 = arith.addf %3, %5 : vector<8x128xf32>
    %7 = tpu.iota {dimensions = array<i32: 0>} : vector<8x128xi32>
    %c6_i32 = arith.constant 6 : i32
    %8 = vector.broadcast %c6_i32 : i32 to vector<8x128xi32>
    %9 = arith.cmpi slt, %7, %8 : vector<8x128xi32>
    %cst_6 = arith.constant 0.000000e+00 : f32
    %10 = vector.broadcast %cst_6 : f32 to vector<8x128xf32>
    %11 = arith.cmpf oge, %6, %10 : vector<8x128xf32>
    %cst_7 = arith.constant 2.000000e-01 : f32
    %12 = vector.broadcast %cst_7 : f32 to vector<8x128xf32>
    %13 = arith.mulf %12, %6 : vector<8x128xf32>
    %14 = arith.select %11, %6, %13 : vector<8x128xi1>, vector<8x128xf32>
    %15 = arith.select %9, %14, %6 : vector<8x128xi1>, vector<8x128xf32>
    %cst_8 = arith.constant 0.000000e+00 : f32
    %16 = vector.broadcast %cst_8 : f32 to vector<8x12xf32>
    %cst_9 = arith.constant 0.000000e+00 : f32
    %17 = vector.broadcast %cst_9 : f32 to vector<8x12xf32>
    %18 = tpu.concatenate %16, %15, %17 in 1 : vector<8x12xf32>, vector<8x128xf32>, vector<8x12xf32> -> vector<8x152xf32>
    %19 = vector.extract_strided_slice %18 {offsets = [0, 0], sizes = [2, 152], strides = [1, 1]} : vector<8x152xf32> to vector<2x152xf32>
    %20 = vector.extract_strided_slice %19 {offsets = [0, 0], sizes = [2, 128], strides = [1, 1]} : vector<2x152xf32> to vector<2x128xf32>
    %21 = vector.extract_strided_slice %19 {offsets = [0, 8], sizes = [2, 128], strides = [1, 1]} : vector<2x152xf32> to vector<2x128xf32>
    %22 = vector.extract_strided_slice %19 {offsets = [0, 16], sizes = [2, 128], strides = [1, 1]} : vector<2x152xf32> to vector<2x128xf32>
    %23 = vector.extract_strided_slice %19 {offsets = [0, 24], sizes = [2, 128], strides = [1, 1]} : vector<2x152xf32> to vector<2x128xf32>
    %24 = vector.extract_strided_slice %18 {offsets = [2, 0], sizes = [2, 152], strides = [1, 1]} : vector<8x152xf32> to vector<2x152xf32>
    %25 = vector.extract_strided_slice %24 {offsets = [0, 6], sizes = [2, 128], strides = [1, 1]} : vector<2x152xf32> to vector<2x128xf32>
    %26 = vector.extract_strided_slice %24 {offsets = [0, 10], sizes = [2, 128], strides = [1, 1]} : vector<2x152xf32> to vector<2x128xf32>
    %27 = vector.extract_strided_slice %24 {offsets = [0, 14], sizes = [2, 128], strides = [1, 1]} : vector<2x152xf32> to vector<2x128xf32>
    %28 = vector.extract_strided_slice %24 {offsets = [0, 18], sizes = [2, 128], strides = [1, 1]} : vector<2x152xf32> to vector<2x128xf32>
    %29 = vector.extract_strided_slice %18 {offsets = [4, 0], sizes = [2, 152], strides = [1, 1]} : vector<8x152xf32> to vector<2x152xf32>
    %30 = vector.extract_strided_slice %29 {offsets = [0, 9], sizes = [2, 128], strides = [1, 1]} : vector<2x152xf32> to vector<2x128xf32>
    %31 = vector.extract_strided_slice %29 {offsets = [0, 11], sizes = [2, 128], strides = [1, 1]} : vector<2x152xf32> to vector<2x128xf32>
    %32 = vector.extract_strided_slice %29 {offsets = [0, 13], sizes = [2, 128], strides = [1, 1]} : vector<2x152xf32> to vector<2x128xf32>
    %33 = vector.extract_strided_slice %29 {offsets = [0, 15], sizes = [2, 128], strides = [1, 1]} : vector<2x152xf32> to vector<2x128xf32>
    %34 = vector.extract_strided_slice %15 {offsets = [6, 0], sizes = [2, 128], strides = [1, 1]} : vector<8x128xf32> to vector<2x128xf32>
    %35 = tpu.concatenate %20, %21, %22, %23, %25, %26, %27, %28, %30, %31, %32, %33, %34 in 0 : vector<2x128xf32>, vector<2x128xf32>, vector<2x128xf32>, vector<2x128xf32>, vector<2x128xf32>, vector<2x128xf32>, vector<2x128xf32>, vector<2x128xf32>, vector<2x128xf32>, vector<2x128xf32>, vector<2x128xf32>, vector<2x128xf32>, vector<2x128xf32> -> vector<26x128xf32>
    %c0_10 = arith.constant 0 : index
    %c0_11 = arith.constant 0 : index
    %36 = vector.load %arg4[%c0_10, %c0_11] : memref<8x26xf32, #tpu.memory_space<vmem>>, vector<8x26xf32>
    %cst_12 = arith.constant dense<0.000000e+00> : vector<8x128xf32>
    %37 = tpu.matmul %36, %35, %cst_12 {dimension_numbers = #tpu.dot_dimension_numbers<[1], [0], [0], [1], [0, 0, 1, 1], [], []>} : vector<8x26xf32>, vector<26x128xf32>, vector<8x128xf32> -> vector<8x128xf32>
    %c0_13 = arith.constant 0 : index
    %c0_14 = arith.constant 0 : index
    %38 = vector.load %arg5[%c0_13, %c0_14] : memref<8x1xf32, #tpu.memory_space<vmem>>, vector<8x1xf32>
    %39 = vector.broadcast %38 : vector<8x1xf32> to vector<8x128xf32>
    %40 = arith.addf %37, %39 : vector<8x128xf32>
    %41 = arith.addf %40, %1 : vector<8x128xf32>
    %cst_15 = arith.constant 0.000000e+00 : f32
    %42 = vector.broadcast %cst_15 : f32 to vector<8x128xf32>
    %43 = arith.cmpf oge, %41, %42 : vector<8x128xf32>
    %cst_16 = arith.constant 2.000000e-01 : f32
    %44 = vector.broadcast %cst_16 : f32 to vector<8x128xf32>
    %45 = arith.mulf %44, %41 : vector<8x128xf32>
    %46 = arith.select %43, %41, %45 : vector<8x128xi1>, vector<8x128xf32>
    %c0_17 = arith.constant 0 : index
    %c0_18 = arith.constant 0 : index
    %c0_19 = arith.constant 0 : index
    %47 = vector.load %arg6[%c0_17, %c0_18, %c0_19] : memref<1x8x128xf32, #tpu.memory_space<vmem>>, vector<1x8x128xf32>
    %48 = vector.shape_cast %47 : vector<1x8x128xf32> to vector<8x128xf32>
    %49 = vector.shape_cast %46 : vector<8x128xf32> to vector<1x8x128xf32>
    tpu.vector_store %arg6[%c0_17, %c0_18, %c0_19], %49 {strides = array<i32>} : memref<1x8x128xf32, #tpu.memory_space<vmem>>, vector<1x8x128xf32>,
    return
  }
  func.func @transform_0(%arg0: i32) -> (i32, i32, i32) {
    %c0_i32 = arith.constant 0 : i32
    %c0_i32_0 = arith.constant 0 : i32
    %c0_i32_1 = arith.constant 0 : i32
    return %arg0, %c0_i32, %c0_i32_0 : i32, i32, i32
  }
  func.func @transform_1(%arg0: i32) -> (i32, i32) {
    %c0_i32 = arith.constant 0 : i32
    %c0_i32_0 = arith.constant 0 : i32
    %c0_i32_1 = arith.constant 0 : i32
    return %c0_i32, %c0_i32_0 : i32, i32
  }
  func.func @transform_2(%arg0: i32) -> (i32, i32) {
    %c0_i32 = arith.constant 0 : i32
    %c0_i32_0 = arith.constant 0 : i32
    %c0_i32_1 = arith.constant 0 : i32
    return %c0_i32, %c0_i32_0 : i32, i32
  }
  func.func @transform_3(%arg0: i32) -> (i32, i32) {
    %c0_i32 = arith.constant 0 : i32
    %c0_i32_0 = arith.constant 0 : i32
    %c0_i32_1 = arith.constant 0 : i32
    return %c0_i32, %c0_i32_0 : i32, i32
  }
  func.func @transform_4(%arg0: i32) -> (i32, i32) {
    %c0_i32 = arith.constant 0 : i32
    %c0_i32_0 = arith.constant 0 : i32
    %c0_i32_1 = arith.constant 0 : i32
    return %c0_i32, %c0_i32_0 : i32, i32
  }
  func.func @transform_5(%arg0: i32) -> (i32, i32, i32) {
    %c0_i32 = arith.constant 0 : i32
    %c0_i32_0 = arith.constant 0 : i32
    %c0_i32_1 = arith.constant 0 : i32
    return %arg0, %c0_i32, %c0_i32_0 : i32, i32, i32
  }
}

</mosaic_0001>

<llo_original>
// kernel: decoder_block_forward.2
$region0: #{decoder_block_forward.2}
  #allocation0 [shape = 'u32[]', space=smem, size = 0x4, offset = 0x4, fixed_abs, tag = 'smem constant byte address 0x4 - core index']
  #allocation1 [shape = 'u32[144,128]{1,0:T(1,128)}', space=vmem, size = 0x12000, scoped, tag = 'internal scratch']
  %s0 = inlined_call_operand.vmem [shape: f32[2,4,128], index: 0, kind: input, shape index: {}]
  %s1 = inlined_call_operand.vmem [shape: f32[2,4,128], index: 1, kind: input, shape index: {}]
  %s2 = inlined_call_operand.vmem [shape: f32[8,32], index: 2, kind: input, shape index: {}]
  %s3 = inlined_call_operand.vmem [shape: f32[8,1], index: 3, kind: input, shape index: {}]
  %s4 = inlined_call_operand.vmem [shape: f32[2,8,128], index: 4, kind: output, shape index: {}]
  %s5 = sld [smem:[#allocation0]]
  $region49: #{decoder_block_forward.2} parent=0
    _
  %s7 = ssub.s32 1, %s5
  %s8 = scalar_select 0, %s7, %s5
  loop: start=0, step=1, limit=4
  $region2: #{decoder_block_forward.2} parent=0 // loop_pre_header
    _
  $region3: #{decoder_block_forward.2} parent=0 // loop_header
    %s10 = sphi 0, %s14
    %p11 = scmp.ge.s32.totalorder %s10, 4
    %s20 = sphi 0, %s22
    %s23 = sphi 0, %s20
    %s24 = sphi 0, %s23
    %s40 = sphi 0, %s24
    %s46 = sphi 0, %s48
    %s49 = sphi 0, %s46
    %s50 = sphi 0, %s49
    %s66 = sphi 0, %s50
    %s70 = sphi 0, %s70
    %s72 = sphi 0, %s70
    %s73 = sphi 0, %s72
    %s87 = sphi 0, %s73
    %s91 = sphi 0, %s91
    %s93 = sphi 0, %s91
    %s94 = sphi 0, %s93
    %s108 = sphi 0, %s94
    %s114 = sphi 0, %s116
    %s117 = sphi 0, %s114
    %s118 = sphi 0, %s117
    %s134 = sphi 0, %s118
  $region4: #{decoder_block_forward.2} parent=0 // loop_header_branch
    %13 = sbr.rel (%p11) target = $region8
  $region5: #{decoder_block_forward.2} parent=0 // loop_body
    %s15 = ssub.s32 %s10, 1
    %s16 = ssub.s32 %s10, 2
    %s17 = sadd.s32 %s10, 1
    %s18 = ssub.s32 %s10, %s17
    %p19 = scmp.eq.s32.totalorder %s18, 0
    %s21 = sadd.s32 %s20, 1
    %s22 = scalar_select %p19, %s20, %s21
    %p25 = pneg %p19
    %p26 = scmp.eq.s32.totalorder %s10, 1
    %p27 = por %p25, %p26
    %p28 = scmp.ne.s32.totalorder %s20, %s23
    %p29 = scmp.eq.s32.totalorder %s10, 0
    %p30 = por %p28, %p29
    %p31 = scmp.ne.s32.totalorder %s20, %s23
    %p32 = scmp.eq.s32.totalorder %s15, 1
    %p33 = por %p31, %p32
    %p34 = scmp.ne.s32.totalorder %s23, %s24
    %p35 = scmp.eq.s32.totalorder %s15, 0
    %p36 = por %p34, %p35
    %p37 = scmp.ne.s32.totalorder %s23, %s24
    %p38 = scmp.eq.s32.totalorder %s16, 1
    %p39 = por %p37, %p38
    %p41 = scmp.ne.s32.totalorder %s24, %s40
    %p42 = scmp.eq.s32.totalorder %s16, 0
    %p43 = por %p41, %p42
    %s44 = ssub.s32 %s10, %s17
    %p45 = scmp.eq.s32.totalorder %s44, 0
    %s47 = sadd.s32 %s46, 1
    %s48 = scalar_select %p45, %s46, %s47
    %p51 = pneg %p45
    %p52 = scmp.eq.s32.totalorder %s10, 1
    %p53 = por %p51, %p52
    %p54 = scmp.ne.s32.totalorder %s46, %s49
    %p55 = scmp.eq.s32.totalorder %s10, 0
    %p56 = por %p54, %p55
    %p57 = scmp.ne.s32.totalorder %s46, %s49
    %p58 = scmp.eq.s32.totalorder %s15, 1
    %p59 = por %p57, %p58
    %p60 = scmp.ne.s32.totalorder %s49, %s50
    %p61 = scmp.eq.s32.totalorder %s15, 0
    %p62 = por %p60, %p61
    %p63 = scmp.ne.s32.totalorder %s49, %s50
    %p64 = scmp.eq.s32.totalorder %s16, 1
    %p65 = por %p63, %p64
    %p67 = scmp.ne.s32.totalorder %s50, %s66
    %p68 = scmp.eq.s32.totalorder %s16, 0
    %p69 = por %p67, %p68
    %s71 = sadd.s32 %s70, 1
    %p74 = scmp.eq.s32.totalorder %s10, 1
    %p75 = scmp.ne.s32.totalorder %s70, %s72
    %p76 = scmp.eq.s32.totalorder %s10, 0
    %p77 = por %p75, %p76
    %p78 = scmp.ne.s32.totalorder %s70, %s72
    %p79 = scmp.eq.s32.totalorder %s15, 1
    %p80 = por %p78, %p79
    %p81 = scmp.ne.s32.totalorder %s72, %s73
    %p82 = scmp.eq.s32.totalorder %s15, 0
    %p83 = por %p81, %p82
    %p84 = scmp.ne.s32.totalorder %s72, %s73
    %p85 = scmp.eq.s32.totalorder %s16, 1
    %p86 = por %p84, %p85
    %p88 = scmp.ne.s32.totalorder %s73, %s87
    %p89 = scmp.eq.s32.totalorder %s16, 0
    %p90 = por %p88, %p89
    %s92 = sadd.s32 %s91, 1
    %p95 = scmp.eq.s32.totalorder %s10, 1
    %p96 = scmp.ne.s32.totalorder %s91, %s93
    %p97 = scmp.eq.s32.totalorder %s10, 0
    %p98 = por %p96, %p97
    %p99 = scmp.ne.s32.totalorder %s91, %s93
    %p100 = scmp.eq.s32.totalorder %s15, 1
    %p101 = por %p99, %p100
    %p102 = scmp.ne.s32.totalorder %s93, %s94
    %p103 = scmp.eq.s32.totalorder %s15, 0
    %p104 = por %p102, %p103
    %p105 = scmp.ne.s32.totalorder %s93, %s94
    %p106 = scmp.eq.s32.totalorder %s16, 1
    %p107 = por %p105, %p106
    %p109 = scmp.ne.s32.totalorder %s94, %s108
    %p110 = scmp.eq.s32.totalorder %s16, 0
    %p111 = por %p109, %p110
    %s112 = ssub.s32 %s10, %s17
    %p113 = scmp.eq.s32.totalorder %s112, 0
    %s115 = sadd.s32 %s114, 1
    %s116 = scalar_select %p113, %s114, %s115
    %p119 = pneg %p113
    %p120 = scmp.eq.s32.totalorder %s10, 1
    %p121 = por %p119, %p120
    %p122 = scmp.ne.s32.totalorder %s114, %s117
    %p123 = scmp.eq.s32.totalorder %s10, 0
    %p124 = por %p122, %p123
    %p125 = scmp.ne.s32.totalorder %s114, %s117
    %p126 = scmp.eq.s32.totalorder %s15, 1
    %p127 = por %p125, %p126
    %p128 = scmp.ne.s32.totalorder %s117, %s118
    %p129 = scmp.eq.s32.totalorder %s15, 0
    %p130 = por %p128, %p129
    %p131 = scmp.ne.s32.totalorder %s117, %s118
    %p132 = scmp.eq.s32.totalorder %s16, 1
    %p133 = por %p131, %p132
    %p135 = scmp.ne.s32.totalorder %s118, %s134
    %p136 = scmp.eq.s32.totalorder %s16, 0
    %p137 = por %p135, %p136
    %p138 = scmp.le.s32.totalorder 1, %s10
    %p139 = scmp.lt.s32.totalorder %s10, 3
    %p140 = pnand %p138, %p139
    %p141 = pneg %p140
    // Predicated region
    $region9: #{decoder_block_forward.2} parent=5 // pred_check
      _
    $region10: #{decoder_block_forward.2} parent=5 // pred_check_branch
      %143 = sbr.rel (%p140) target = $region12
    $region11: #{decoder_block_forward.2} parent=5 // pred_region
      %s144 = ssub.s32 %s10, 1
      // Predicated region
      $region13: #{decoder_block_forward.2} parent=11 // pred_check
        %p145 = pneg %p83
      $region14: #{decoder_block_forward.2} parent=11 // pred_check_branch
        %147 = sbr.rel (%p145) target = $region16
      $region15: #{decoder_block_forward.2} parent=11 // pred_region
        _
      $region16: #{decoder_block_forward.2} parent=11 // pred_fallthru
        _
      // Predicated region
      $region17: #{decoder_block_forward.2} parent=11 // pred_check
        %p148 = pneg %p104
      $region18: #{decoder_block_forward.2} parent=11 // pred_check_branch
        %150 = sbr.rel (%p148) target = $region20
      $region19: #{decoder_block_forward.2} parent=11 // pred_region
        _
      $region20: #{decoder_block_forward.2} parent=11 // pred_fallthru
        _
    $region12: #{decoder_block_forward.2} parent=5 // pred_fallthru
      _
    %p151 = scmp.lt.s32.totalorder %s10, 2
    // Predicated region
    $region21: #{decoder_block_forward.2} parent=5 // pred_check
      %p152 = pneg %p151
    $region22: #{decoder_block_forward.2} parent=5 // pred_check_branch
      %154 = sbr.rel (%p152) target = $region24
    $region23: #{decoder_block_forward.2} parent=5 // pred_region
      // Predicated region
      $region25: #{decoder_block_forward.2} parent=23 // pred_check
        %p155 = pneg %p30
      $region26: #{decoder_block_forward.2} parent=23 // pred_check_branch
        %157 = sbr.rel (%p155) target = $region28
      $region27: #{decoder_block_forward.2} parent=23 // pred_region
        %p158 = scmp.lt.s32.totalorder %s10, 1
        %s159 = scalar_select %p158, %s10, 1
        %s160 = smul.addr %s159, 4
        %s161 = scalar_lea.vmem %s0, %s160
      $region28: #{decoder_block_forward.2} parent=23 // pred_fallthru
        _
      // Predicated region
      $region29: #{decoder_block_forward.2} parent=23 // pred_check
        %p162 = pneg %p56
      $region30: #{decoder_block_forward.2} parent=23 // pred_check_branch
        %164 = sbr.rel (%p162) target = $region32
      $region31: #{decoder_block_forward.2} parent=23 // pred_region
        %p165 = scmp.lt.s32.totalorder %s10, 1
        %s166 = scalar_select %p165, %s10, 1
        %s167 = smul.addr %s166, 4
        %s168 = scalar_lea.vmem %s1, %s167
      $region32: #{decoder_block_forward.2} parent=23 // pred_fallthru
        _
    $region24: #{decoder_block_forward.2} parent=5 // pred_fallthru
      _
    %p169 = scmp.le.s32.totalorder 1, %s10
    %p170 = scmp.lt.s32.totalorder %s10, 3
    %p171 = pnand %p169, %p170
    %p172 = pneg %p171
    // Predicated region
    $region33: #{decoder_block_forward.2} parent=5 // pred_check
      _
    $region34: #{decoder_block_forward.2} parent=5 // pred_check_branch
      %174 = sbr.rel (%p171) target = $region36
    $region35: #{decoder_block_forward.2} parent=5 // pred_region
      %s175 = ssub.s32 %s10, 1
      %p176 = scmp.lt.s32.totalorder %s15, 1
      %s177 = scalar_select %p176, %s15, 1
      %s178 = smul.addr %s177, 4
      %s179 = scalar_lea.vmem %s0, %s178
      %p180 = pneg %p36
      %p181 = pneg %p33
      %p182 = scmp.lt.s32.totalorder %s15, 1
      %s183 = scalar_select %p182, %s15, 1
      %s184 = smul.addr %s183, 4
      %s185 = scalar_lea.vmem %s1, %s184
      %p186 = pneg %p62
      %p187 = pneg %p59
      %p188 = pneg %p83
      %p189 = pneg %p80
      %p190 = pneg %p104
      %p191 = pneg %p101
      %p192 = pneg %p130
      %p193 = pneg %p127
      %p194 = scmp.lt.s32.totalorder %s15, 1
      %s195 = scalar_select %p194, %s15, 1
      %s196 = smul.addr %s195, 8
      %s197 = scalar_lea.vmem %s4, %s196
      %p198 = scmp.lt.s32.totalorder %s15, 1
      %s199 = scalar_select %p198, %s15, 1
      %s200 = smul.addr %s199, 4
      %s201 = scalar_lea.vmem %s0, %s200
      %p202 = scmp.lt.s32.totalorder %s15, 1
      %s203 = scalar_select %p202, %s15, 1
      %s204 = smul.addr %s203, 4
      %s205 = scalar_lea.vmem %s1, %s204
      %p206 = scmp.lt.s32.totalorder %s15, 1
      %s207 = scalar_select %p206, %s15, 1
      %s208 = smul.addr %s207, 8
      %s209 = scalar_lea.vmem %s4, %s208
      %v210 = vld [vmem:[%s201] sm:$0xf]
      %v211 = vld [vmem:[%s205] sm:$0xf]
      %v213 = vrot.slane %v211, 4
      %vm215 = vcmask 1043456
      %v216 = vsel %vm215, %v210, %v213
      %218 = vrot.lane.b32.xlu0 %v216, 1
      %v219 = vpop.permute.xlu0 %218
      %vm221 = vcmask 7168
      %v222 = vsel %vm221, 0.0, %v219
      %v223 = vsel %vm221, %v219, 0.0
      %226 = vrot.lane.b32.xlu0 %v222, 127
      %v227 = vpop.permute.xlu0 %226
      %228 = vrot.lane.b32.xlu0 %v223, 127
      %v229 = vpop.permute.xlu0 %228
      %vm230 = vcmask 1039360
      %v231 = vsel %vm230, %v227, %v229
      %233 = vrot.lane.b32.xlu0 %v222, 126
      %v234 = vpop.permute.xlu0 %233
      %235 = vrot.lane.b32.xlu0 %v223, 126
      %v236 = vpop.permute.xlu0 %235
      %vm237 = vcmask 1031168
      %v238 = vsel %vm237, %v234, %v236
      %240 = vrot.lane.b32.xlu0 %v222, 125
      %v241 = vpop.permute.xlu0 %240
      %242 = vrot.lane.b32.xlu0 %v223, 125
      %v243 = vpop.permute.xlu0 %242
      %vm244 = vcmask 1022976
      %v245 = vsel %vm244, %v241, %v243
      %v247 = vld [vmem:[%s2] sm:$0xff]
      %v248 = vld [vmem:[%s3] sm:$0xff]
      %250 = vset.pattern.permute.xlu0 0
      %251 = vperm.xlu0 %250, %v248
      %v252 = vpop.permute.xlu0 %251
      %vm254 = vcmask 261120
      %v256 = vsel %vm254, %v247, 0
      %258 = vmatprep.subr.mxu0 0.0
      %259 = vmatpush1.msra.mxu0 0.0
      %260 = vmatprep.subr.mxu0 0.0
      %261 = vmatpush1.msra.mxu0 0.0
      %262 = vmatprep.subr.mxu0 0.0
      %263 = vmatpush1.msra.mxu0 0.0
      %264 = vmatprep.subr.mxu0 0.0
      %265 = vmatpush1.msra.mxu0 0.0
      %266 = vmatprep.subr.mxu0 0.0
      %267 = vmatpush1.msra.mxu0 0.0
      %268 = vmatprep.subr.mxu0 0.0
      %269 = vmatpush1.msra.mxu0 0.0
      %270 = vmatprep.subr.mxu0 0.0
      %271 = vmatpush1.msra.mxu0 0.0
      %272 = vmatprep.subr.mxu0 0.0
      %273 = vmatpush1.msra.mxu0 0.0
      %274 = vmatprep.subr.mxu0 0.0
      %275 = vmatpush1.msra.mxu0 0.0
      %276 = vmatprep.subr.mxu0 0.0
      %277 = vmatpush1.msra.mxu0 0.0
      %278 = vmatprep.subr.mxu0 0.0
      %279 = vmatpush1.msra.mxu0 0.0
      %280 = vmatprep.subr.mxu0 0.0
      %281 = vmatpush1.msra.mxu0 0.0
      %282 = vmatprep.subr.mxu0 0.0
      %283 = vmatpush1.msra.mxu0 %v245
      %284 = vmatprep.subr.mxu0 0.0
      %285 = vmatpush1.msra.mxu0 %v238
      %286 = vmatprep.subr.mxu0 0.0
      %287 = vmatpush1.msra.mxu0 %v231
      %288 = vmatprep.subr.mxu0 0.0
      %289 = vmatpush1.msra.mxu0 %v222
      %290 = vmatprep.subr.mxu0 0.0
      %291 = vmatpush2.msra.mxu0 0.0
      %292 = vmatprep.subr.mxu0 0.0
      %293 = vmatpush2.msra.mxu0 0.0
      %294 = vmatprep.subr.mxu0 0.0
      %295 = vmatpush2.msra.mxu0 0.0
      %296 = vmatprep.subr.mxu0 0.0
      %297 = vmatpush2.msra.mxu0 0.0
      %298 = vmatprep.subr.mxu0 0.0
      %299 = vmatpush2.msra.mxu0 0.0
      %300 = vmatprep.subr.mxu0 0.0
      %301 = vmatpush2.msra.mxu0 0.0
      %302 = vmatprep.subr.mxu0 0.0
      %303 = vmatpush2.msra.mxu0 0.0
      %304 = vmatprep.subr.mxu0 0.0
      %305 = vmatpush2.msra.mxu0 0.0
      %306 = vmatprep.subr.mxu0 0.0
      %307 = vmatpush2.msra.mxu0 0.0
      %308 = vmatprep.subr.mxu0 0.0
      %309 = vmatpush2.msra.mxu0 0.0
      %310 = vmatprep.subr.mxu0 0.0
      %311 = vmatpush2.msra.mxu0 0.0
      %312 = vmatprep.subr.mxu0 0.0
      %313 = vmatpush2.msra.mxu0 0.0
      %314 = vmatprep.subr.mxu0 0.0
      %315 = vmatpush2.msra.mxu0 0.0
      %316 = vmatprep.subr.mxu0 0.0
      %317 = vmatpush2.msra.mxu0 0.0
      %318 = vmatprep.subr.mxu0 0.0
      %319 = vmatpush2.msra.mxu0 0.0
      %320 = vmatprep.subr.mxu0 0.0
      %321 = vmatpush2.msra.mxu0 0.0
      %322 = vmatprep.mubr.f32.mxu0 0.0
      %323 = vmatmul.mubr.f32.gmra.mxu0 %v256
      %v324 = vpop.f32.mrf.mxu0
      %v325 = vadd.f32 %v252, %v324
      %v326 = vpop.f32.mrf.mxu0
      %327 = vdwg.mxu0
      %vm328 = vcmp.ge.f32.partialorder %v325, 0.0
      %v329 = vmul.f32 %v325, 0.2
      %v330 = vsel %vm328, %v325, %v329
      %331 = vst [vmem:[%s209] sm:$0xff] %v330
      %p332 = scmp.lt.s32.totalorder %s15, 1
      %s333 = scalar_select %p332, %s15, 1
      %s334 = smul.addr %s333, 8
      %s335 = scalar_lea.vmem %s4, %s334
      // Predicated region
      $region37: #{decoder_block_forward.2} parent=35 // pred_check
        %p336 = pneg %p127
      $region38: #{decoder_block_forward.2} parent=35 // pred_check_branch
        %338 = sbr.rel (%p336) target = $region40
      $region39: #{decoder_block_forward.2} parent=35 // pred_region
        _
      $region40: #{decoder_block_forward.2} parent=35 // pred_fallthru
        _
    $region36: #{decoder_block_forward.2} parent=5 // pred_fallthru
      _
    %p339 = scmp.le.s32.totalorder 2, %s10
    // Predicated region
    $region41: #{decoder_block_forward.2} parent=5 // pred_check
      %p340 = pneg %p339
    $region42: #{decoder_block_forward.2} parent=5 // pred_check_branch
      %342 = sbr.rel (%p340) target = $region44
    $region43: #{decoder_block_forward.2} parent=5 // pred_region
      %s343 = ssub.s32 %s10, 2
      // Predicated region
      $region45: #{decoder_block_forward.2} parent=43 // pred_check
        %p344 = pneg %p133
      $region46: #{decoder_block_forward.2} parent=43 // pred_check_branch
        %346 = sbr.rel (%p344) target = $region48
      $region47: #{decoder_block_forward.2} parent=43 // pred_region
        %p347 = scmp.lt.s32.totalorder %s16, 1
        %s348 = scalar_select %p347, %s16, 1
        %s349 = smul.addr %s348, 8
        %s350 = scalar_lea.vmem %s4, %s349
      $region48: #{decoder_block_forward.2} parent=43 // pred_fallthru
        _
    $region44: #{decoder_block_forward.2} parent=5 // pred_fallthru
      _
  $region6: #{decoder_block_forward.2} parent=0 // loop_footer
    %s14 = sadd.s32 1, %s10
  $region7: #{decoder_block_forward.2} parent=0 // loop_footer_branch
    %9 = sbr.rel target = $region3
  $region8: #{decoder_block_forward.2} parent=0 // loop_exit
    _

// kernel: decoder_block_forward.3
$region0: #{decoder_block_forward.3}
  #allocation0 [shape = 'u32[]', space=smem, size = 0x4, offset = 0x4, fixed_abs, tag = 'smem constant byte address 0x4 - core index']
  #allocation1 [shape = 'u32[144,128]{1,0:T(1,128)}', space=vmem, size = 0x12000, scoped, tag = 'internal scratch']
  %s0 = inlined_call_operand.vmem [shape: f32[2,8,128], index: 0, kind: input, shape index: {}]
  %s1 = inlined_call_operand.vmem [shape: f32[8,8], index: 1, kind: input, shape index: {}]
  %s2 = inlined_call_operand.vmem [shape: f32[8,1], index: 2, kind: input, shape index: {}]
  %s3 = inlined_call_operand.vmem [shape: f32[8,26], index: 3, kind: input, shape index: {}]
  %s4 = inlined_call_operand.vmem [shape: f32[8,1], index: 4, kind: input, shape index: {}]
  %s5 = inlined_call_operand.hbm [shape: f32[2,8,128], index: 5, kind: output, shape index: {}]
  %s6 = sld [smem:[#allocation0]]
  $region53: #{decoder_block_forward.3} parent=0
    _
  %s8 = ssub.s32 1, %s6
  %s9 = scalar_select 0, %s8, %s6
  $region1: #{decoder_block_forward.3} parent=0
    #allocation2 [shape = 'u8[8192]{0}', space=vmem, size = 0x2000, scoped, tag = 'output window, operand 0']
    #allocation3 [shape = 's32[2]{0}', space=sflag, size = 0x8, scoped, tag = 'scoped memory for decoder_block_forward.3']
    %10 = vsyncpa [#allocation3], 0
    %s11 = scalar_lea.sflag [#allocation3], 1
    %12 = vsyncpa %s11, 0
    loop: start=0, step=1, limit=4
    $region2: #{decoder_block_forward.3} parent=1 // loop_pre_header
      _
    $region3: #{decoder_block_forward.3} parent=1 // loop_header
      %s14 = sphi 0, %s18
      %p15 = scmp.ge.s32.totalorder %s14, 4
      %s24 = sphi 0, %s26
      %s27 = sphi 0, %s24
      %s28 = sphi 0, %s27
      %s44 = sphi 0, %s28
      %s48 = sphi 0, %s48
      %s50 = sphi 0, %s48
      %s51 = sphi 0, %s50
      %s65 = sphi 0, %s51
      %s69 = sphi 0, %s69
      %s71 = sphi 0, %s69
      %s72 = sphi 0, %s71
      %s86 = sphi 0, %s72
      %s90 = sphi 0, %s90
      %s92 = sphi 0, %s90
      %s93 = sphi 0, %s92
      %s107 = sphi 0, %s93
      %s111 = sphi 0, %s111
      %s113 = sphi 0, %s111
      %s114 = sphi 0, %s113
      %s128 = sphi 0, %s114
      %s134 = sphi 0, %s136
      %s137 = sphi 0, %s134
      %s138 = sphi 0, %s137
      %s154 = sphi 0, %s138
    $region4: #{decoder_block_forward.3} parent=1 // loop_header_branch
      %17 = sbr.rel (%p15) target = $region8
    $region5: #{decoder_block_forward.3} parent=1 // loop_body
      %s19 = ssub.s32 %s14, 1
      %s20 = ssub.s32 %s14, 2
      %s21 = sadd.s32 %s14, 1
      %s22 = ssub.s32 %s14, %s21
      %p23 = scmp.eq.s32.totalorder %s22, 0
      %s25 = sadd.s32 %s24, 1
      %s26 = scalar_select %p23, %s24, %s25
      %p29 = pneg %p23
      %p30 = scmp.eq.s32.totalorder %s14, 1
      %p31 = por %p29, %p30
      %p32 = scmp.ne.s32.totalorder %s24, %s27
      %p33 = scmp.eq.s32.totalorder %s14, 0
      %p34 = por %p32, %p33
      %p35 = scmp.ne.s32.totalorder %s24, %s27
      %p36 = scmp.eq.s32.totalorder %s19, 1
      %p37 = por %p35, %p36
      %p38 = scmp.ne.s32.totalorder %s27, %s28
      %p39 = scmp.eq.s32.totalorder %s19, 0
      %p40 = por %p38, %p39
      %p41 = scmp.ne.s32.totalorder %s27, %s28
      %p42 = scmp.eq.s32.totalorder %s20, 1
      %p43 = por %p41, %p42
      %p45 = scmp.ne.s32.totalorder %s28, %s44
      %p46 = scmp.eq.s32.totalorder %s20, 0
      %p47 = por %p45, %p46
      %s49 = sadd.s32 %s48, 1
      %p52 = scmp.eq.s32.totalorder %s14, 1
      %p53 = scmp.ne.s32.totalorder %s48, %s50
      %p54 = scmp.eq.s32.totalorder %s14, 0
      %p55 = por %p53, %p54
      %p56 = scmp.ne.s32.totalorder %s48, %s50
      %p57 = scmp.eq.s32.totalorder %s19, 1
      %p58 = por %p56, %p57
      %p59 = scmp.ne.s32.totalorder %s50, %s51
      %p60 = scmp.eq.s32.totalorder %s19, 0
      %p61 = por %p59, %p60
      %p62 = scmp.ne.s32.totalorder %s50, %s51
      %p63 = scmp.eq.s32.totalorder %s20, 1
      %p64 = por %p62, %p63
      %p66 = scmp.ne.s32.totalorder %s51, %s65
      %p67 = scmp.eq.s32.totalorder %s20, 0
      %p68 = por %p66, %p67
      %s70 = sadd.s32 %s69, 1
      %p73 = scmp.eq.s32.totalorder %s14, 1
      %p74 = scmp.ne.s32.totalorder %s69, %s71
      %p75 = scmp.eq.s32.totalorder %s14, 0
      %p76 = por %p74, %p75
      %p77 = scmp.ne.s32.totalorder %s69, %s71
      %p78 = scmp.eq.s32.totalorder %s19, 1
      %p79 = por %p77, %p78
      %p80 = scmp.ne.s32.totalorder %s71, %s72
      %p81 = scmp.eq.s32.totalorder %s19, 0
      %p82 = por %p80, %p81
      %p83 = scmp.ne.s32.totalorder %s71, %s72
      %p84 = scmp.eq.s32.totalorder %s20, 1
      %p85 = por %p83, %p84
      %p87 = scmp.ne.s32.totalorder %s72, %s86
      %p88 = scmp.eq.s32.totalorder %s20, 0
      %p89 = por %p87, %p88
      %s91 = sadd.s32 %s90, 1
      %p94 = scmp.eq.s32.totalorder %s14, 1
      %p95 = scmp.ne.s32.totalorder %s90, %s92
      %p96 = scmp.eq.s32.totalorder %s14, 0
      %p97 = por %p95, %p96
      %p98 = scmp.ne.s32.totalorder %s90, %s92
      %p99 = scmp.eq.s32.totalorder %s19, 1
      %p100 = por %p98, %p99
      %p101 = scmp.ne.s32.totalorder %s92, %s93
      %p102 = scmp.eq.s32.totalorder %s19, 0
      %p103 = por %p101, %p102
      %p104 = scmp.ne.s32.totalorder %s92, %s93
      %p105 = scmp.eq.s32.totalorder %s20, 1
      %p106 = por %p104, %p105
      %p108 = scmp.ne.s32.totalorder %s93, %s107
      %p109 = scmp.eq.s32.totalorder %s20, 0
      %p110 = por %p108, %p109
      %s112 = sadd.s32 %s111, 1
      %p115 = scmp.eq.s32.totalorder %s14, 1
      %p116 = scmp.ne.s32.totalorder %s111, %s113
      %p117 = scmp.eq.s32.totalorder %s14, 0
      %p118 = por %p116, %p117
      %p119 = scmp.ne.s32.totalorder %s111, %s113
      %p120 = scmp.eq.s32.totalorder %s19, 1
      %p121 = por %p119, %p120
      %p122 = scmp.ne.s32.totalorder %s113, %s114
      %p123 = scmp.eq.s32.totalorder %s19, 0
      %p124 = por %p122, %p123
      %p125 = scmp.ne.s32.totalorder %s113, %s114
      %p126 = scmp.eq.s32.totalorder %s20, 1
      %p127 = por %p125, %p126
      %p129 = scmp.ne.s32.totalorder %s114, %s128
      %p130 = scmp.eq.s32.totalorder %s20, 0
      %p131 = por %p129, %p130
      %s132 = ssub.s32 %s14, %s21
      %p133 = scmp.eq.s32.totalorder %s132, 0
      %s135 = sadd.s32 %s134, 1
      %s136 = scalar_select %p133, %s134, %s135
      %p139 = pneg %p133
      %p140 = scmp.eq.s32.totalorder %s14, 1
      %p141 = por %p139, %p140
      %p142 = scmp.ne.s32.totalorder %s134, %s137
      %p143 = scmp.eq.s32.totalorder %s14, 0
      %p144 = por %p142, %p143
      %p145 = scmp.ne.s32.totalorder %s134, %s137
      %p146 = scmp.eq.s32.totalorder %s19, 1
      %p147 = por %p145, %p146
      %p148 = scmp.ne.s32.totalorder %s137, %s138
      %p149 = scmp.eq.s32.totalorder %s19, 0
      %p150 = por %p148, %p149
      %p151 = scmp.ne.s32.totalorder %s137, %s138
      %p152 = scmp.eq.s32.totalorder %s20, 1
      %p153 = por %p151, %p152
      %p155 = scmp.ne.s32.totalorder %s138, %s154
      %p156 = scmp.eq.s32.totalorder %s20, 0
      %p157 = por %p155, %p156
      %p158 = scmp.le.s32.totalorder 1, %s14
      %p159 = scmp.lt.s32.totalorder %s14, 3
      %p160 = pnand %p158, %p159
      %p161 = pneg %p160
      // Predicated region
      $region9: #{decoder_block_forward.3} parent=5 // pred_check
        _
      $region10: #{decoder_block_forward.3} parent=5 // pred_check_branch
        %163 = sbr.rel (%p160) target = $region12
      $region11: #{decoder_block_forward.3} parent=5 // pred_region
        %s164 = ssub.s32 %s14, 1
        // Predicated region
        $region13: #{decoder_block_forward.3} parent=11 // pred_check
          %p165 = pneg %p61
        $region14: #{decoder_block_forward.3} parent=11 // pred_check_branch
          %167 = sbr.rel (%p165) target = $region16
        $region15: #{decoder_block_forward.3} parent=11 // pred_region
          _
        $region16: #{decoder_block_forward.3} parent=11 // pred_fallthru
          _
        // Predicated region
        $region17: #{decoder_block_forward.3} parent=11 // pred_check
          %p168 = pneg %p82
        $region18: #{decoder_block_forward.3} parent=11 // pred_check_branch
          %170 = sbr.rel (%p168) target = $region20
        $region19: #{decoder_block_forward.3} parent=11 // pred_region
          _
        $region20: #{decoder_block_forward.3} parent=11 // pred_fallthru
          _
        // Predicated region
        $region21: #{decoder_block_forward.3} parent=11 // pred_check
          %p171 = pneg %p103
        $region22: #{decoder_block_forward.3} parent=11 // pred_check_branch
          %173 = sbr.rel (%p171) target = $region24
        $region23: #{decoder_block_forward.3} parent=11 // pred_region
          _
        $region24: #{decoder_block_forward.3} parent=11 // pred_fallthru
          _
        // Predicated region
        $region25: #{decoder_block_forward.3} parent=11 // pred_check
          %p174 = pneg %p124
        $region26: #{decoder_block_forward.3} parent=11 // pred_check_branch
          %176 = sbr.rel (%p174) target = $region28
        $region27: #{decoder_block_forward.3} parent=11 // pred_region
          _
        $region28: #{decoder_block_forward.3} parent=11 // pred_fallthru
          _
      $region12: #{decoder_block_forward.3} parent=5 // pred_fallthru
        _
      %p177 = scmp.lt.s32.totalorder %s14, 2
      // Predicated region
      $region29: #{decoder_block_forward.3} parent=5 // pred_check
        %p178 = pneg %p177
      $region30: #{decoder_block_forward.3} parent=5 // pred_check_branch
        %180 = sbr.rel (%p178) target = $region32
      $region31: #{decoder_block_forward.3} parent=5 // pred_region
        // Predicated region
        $region33: #{decoder_block_forward.3} parent=31 // pred_check
          %p181 = pneg %p34
        $region34: #{decoder_block_forward.3} parent=31 // pred_check_branch
          %183 = sbr.rel (%p181) target = $region36
        $region35: #{decoder_block_forward.3} parent=31 // pred_region
          %p184 = scmp.lt.s32.totalorder %s14, 1
          %s185 = scalar_select %p184, %s14, 1
          %s186 = smul.addr %s185, 8
          %s187 = scalar_lea.vmem %s0, %s186
        $region36: #{decoder_block_forward.3} parent=31 // pred_fallthru
          _
      $region32: #{decoder_block_forward.3} parent=5 // pred_fallthru
        _
      %p188 = scmp.le.s32.totalorder 1, %s14
      %p189 = scmp.lt.s32.totalorder %s14, 3
      %p190 = pnand %p188, %p189
      %p191 = pneg %p190
      // Predicated region
      $region37: #{decoder_block_forward.3} parent=5 // pred_check
        _
      $region38: #{decoder_block_forward.3} parent=5 // pred_check_branch
        %193 = sbr.rel (%p190) target = $region40
      $region39: #{decoder_block_forward.3} parent=5 // pred_region
        %s194 = ssub.s32 %s14, 1
        %p195 = scmp.lt.s32.totalorder %s19, 1
        %s196 = scalar_select %p195, %s19, 1
        %s197 = smul.addr %s196, 8
        %s198 = scalar_lea.vmem %s0, %s197
        %p199 = pneg %p40
        %p200 = pneg %p37
        %p201 = pneg %p61
        %p202 = pneg %p58
        %p203 = pneg %p82
        %p204 = pneg %p79
        %p205 = pneg %p103
        %p206 = pneg %p100
        %p207 = pneg %p124
        %p208 = pneg %p121
        %p209 = pneg %p150
        %p210 = pneg %p147
        %s211 = sand.u32 %s137, 1
        %s212 = scalar_lea.sflag [#allocation3], %s211
        %s213 = sand.u32 %s137, 1
        %s214 = smul.addr %s213, 8
        %s215 = scalar_lea.vmem [#allocation2], %s214
        %p216 = scmp.lt.s32.totalorder %s19, 1
        %s217 = scalar_select %p216, %s19, 1
        %s218 = smul.addr %s217, 8
        %s219 = scalar_lea.vmem %s0, %s218
        %v220 = vld [vmem:[%s219] sm:$0xff]
        %v221 = vld [vmem:[%s1] sm:$0xff]
        %v222 = vld [vmem:[%s2] sm:$0xff]
        %224 = vset.pattern.permute.xlu0 0
        %225 = vperm.xlu0 %224, %v222
        %v226 = vpop.permute.xlu0 %225
        %vm228 = vcmask 64512
        %v230 = vsel %vm228, %v221, 0
        %232 = vmatprep.subr.mxu0 0.0
        %233 = vmatpush1.msra.mxu0 0.0
        %234 = vmatprep.subr.mxu0 0.0
        %235 = vmatpush1.msra.mxu0 0.0
        %236 = vmatprep.subr.mxu0 0.0
        %237 = vmatpush1.msra.mxu0 0.0
        %238 = vmatprep.subr.mxu0 0.0
        %239 = vmatpush1.msra.mxu0 0.0
        %240 = vmatprep.subr.mxu0 0.0
        %241 = vmatpush1.msra.mxu0 0.0
        %242 = vmatprep.subr.mxu0 0.0
        %243 = vmatpush1.msra.mxu0 0.0
        %244 = vmatprep.subr.mxu0 0.0
        %245 = vmatpush1.msra.mxu0 0.0
        %246 = vmatprep.subr.mxu0 0.0
        %247 = vmatpush1.msra.mxu0 0.0
        %248 = vmatprep.subr.mxu0 0.0
        %249 = vmatpush1.msra.mxu0 0.0
        %250 = vmatprep.subr.mxu0 0.0
        %251 = vmatpush1.msra.mxu0 0.0
        %252 = vmatprep.subr.mxu0 0.0
        %253 = vmatpush1.msra.mxu0 0.0
        %254 = vmatprep.subr.mxu0 0.0
        %255 = vmatpush1.msra.mxu0 0.0
        %256 = vmatprep.subr.mxu0 0.0
        %257 = vmatpush1.msra.mxu0 0.0
        %258 = vmatprep.subr.mxu0 0.0
        %259 = vmatpush1.msra.mxu0 0.0
        %260 = vmatprep.subr.mxu0 0.0
        %261 = vmatpush1.msra.mxu0 0.0
        %262 = vmatprep.subr.mxu0 0.0
        %263 = vmatpush1.msra.mxu0 %v220
        %264 = vmatprep.subr.mxu0 0.0
        %265 = vmatpush2.msra.mxu0 0.0
        %266 = vmatprep.subr.mxu0 0.0
        %267 = vmatpush2.msra.mxu0 0.0
        %268 = vmatprep.subr.mxu0 0.0
        %269 = vmatpush2.msra.mxu0 0.0
        %270 = vmatprep.subr.mxu0 0.0
        %271 = vmatpush2.msra.mxu0 0.0
        %272 = vmatprep.subr.mxu0 0.0
        %273 = vmatpush2.msra.mxu0 0.0
        %274 = vmatprep.subr.mxu0 0.0
        %275 = vmatpush2.msra.mxu0 0.0
        %276 = vmatprep.subr.mxu0 0.0
        %277 = vmatpush2.msra.mxu0 0.0
        %278 = vmatprep.subr.mxu0 0.0
        %279 = vmatpush2.msra.mxu0 0.0
        %280 = vmatprep.subr.mxu0 0.0
        %281 = vmatpush2.msra.mxu0 0.0
        %282 = vmatprep.subr.mxu0 0.0
        %283 = vmatpush2.msra.mxu0 0.0
        %284 = vmatprep.subr.mxu0 0.0
        %285 = vmatpush2.msra.mxu0 0.0
        %286 = vmatprep.subr.mxu0 0.0
        %287 = vmatpush2.msra.mxu0 0.0
        %288 = vmatprep.subr.mxu0 0.0
        %289 = vmatpush2.msra.mxu0 0.0
        %290 = vmatprep.subr.mxu0 0.0
        %291 = vmatpush2.msra.mxu0 0.0
        %292 = vmatprep.subr.mxu0 0.0
        %293 = vmatpush2.msra.mxu0 0.0
        %294 = vmatprep.subr.mxu0 0.0
        %295 = vmatpush2.msra.mxu0 0.0
        %296 = vmatprep.mubr.f32.mxu0 0.0
        %297 = vmatmul.mubr.f32.gmra.mxu0 %v230
        %v298 = vpop.f32.mrf.mxu0
        %v299 = vadd.f32 %v226, %v298
        %v300 = vpop.f32.mrf.mxu0
        %301 = vdwg.mxu0
        %v302 = vlaneseq
        %v303 = vshrl.u32 %v302, 7
        %vm304 = vcmp.lt.s32.totalorder %v303, 6
        %vm305 = vcmp.ge.f32.partialorder %v299, 0.0
        %v306 = vmul.f32 %v299, 0.2
        %v307 = vsel %vm305, %v299, %v306
        %v308 = vsel %vm304, %v307, %v299
        %310 = vrot.lane.b32.xlu0 %v308, 12
        %v311 = vpop.permute.xlu0 %310
        %vm313 = vcmask 97280
        %v314 = vsel %vm313, 0.0, %v311
        %v315 = vsel %vm313, %v311, 0.0
        %v318 = vrot.slane %v314, 6
        %v319 = vrot.slane %v315, 6
        %320 = vrot.lane.b32.xlu0 %v318, 120
        %v321 = vpop.permute.xlu0 %320
        %322 = vrot.lane.b32.xlu0 %v319, 120
        %v323 = vpop.permute.xlu0 %322
        %vm324 = vcmask 982016
        %v325 = vsel %vm324, %v321, %v323
        %v327 = vrot.slane %v314, 4
        %v328 = vrot.slane %v315, 4
        %329 = vrot.lane.b32.xlu0 %v327, 112
        %v330 = vpop.permute.xlu0 %329
        %331 = vrot.lane.b32.xlu0 %v328, 112
        %v332 = vpop.permute.xlu0 %331
        %vm333 = vcmask 916480
        %v334 = vsel %vm333, %v330, %v332
        %v336 = vrot.slane %v314, 2
        %v337 = vrot.slane %v315, 2
        %338 = vrot.lane.b32.xlu0 %v336, 104
        %v339 = vpop.permute.xlu0 %338
        %340 = vrot.lane.b32.xlu0 %v337, 104
        %v341 = vpop.permute.xlu0 %340
        %vm342 = vcmask 850944
        %v343 = vsel %vm342, %v339, %v341
        %345 = vrot.lane.b32.xlu0 %v336, 122
        %v346 = vpop.permute.xlu0 %345
        %347 = vrot.lane.b32.xlu0 %v337, 122
        %v348 = vpop.permute.xlu0 %347
        %vm349 = vcmask 998400
        %v350 = vsel %vm349, %v346, %v348
        %352 = vrot.lane.b32.xlu0 %v314, 118
        %v353 = vpop.permute.xlu0 %352
        %354 = vrot.lane.b32.xlu0 %v315, 118
        %v355 = vpop.permute.xlu0 %354
        %vm356 = vcmask 965632
        %v357 = vsel %vm356, %v353, %v355
        %359 = vrot.lane.b32.xlu0 %v318, 114
        %v360 = vpop.permute.xlu0 %359
        %361 = vrot.lane.b32.xlu0 %v319, 114
        %v362 = vpop.permute.xlu0 %361
        %vm363 = vcmask 932864
        %v364 = vsel %vm363, %v360, %v362
        %366 = vrot.lane.b32.xlu0 %v327, 110
        %v367 = vpop.permute.xlu0 %366
        %368 = vrot.lane.b32.xlu0 %v328, 110
        %v369 = vpop.permute.xlu0 %368
        %vm370 = vcmask 900096
        %v371 = vsel %vm370, %v367, %v369
        %373 = vrot.lane.b32.xlu0 %v327, 119
        %v374 = vpop.permute.xlu0 %373
        %375 = vrot.lane.b32.xlu0 %v328, 119
        %v376 = vpop.permute.xlu0 %375
        %vm377 = vcmask 973824
        %v378 = vsel %vm377, %v374, %v376
        %380 = vrot.lane.b32.xlu0 %v336, 117
        %v381 = vpop.permute.xlu0 %380
        %382 = vrot.lane.b32.xlu0 %v337, 117
        %v383 = vpop.permute.xlu0 %382
        %vm384 = vcmask 957440
        %v385 = vsel %vm384, %v381, %v383
        %387 = vrot.lane.b32.xlu0 %v314, 115
        %v388 = vpop.permute.xlu0 %387
        %389 = vrot.lane.b32.xlu0 %v315, 115
        %v390 = vpop.permute.xlu0 %389
        %vm391 = vcmask 941056
        %v392 = vsel %vm391, %v388, %v390
        %394 = vrot.lane.b32.xlu0 %v318, 113
        %v395 = vpop.permute.xlu0 %394
        %396 = vrot.lane.b32.xlu0 %v319, 113
        %v397 = vpop.permute.xlu0 %396
        %vm398 = vcmask 924672
        %v399 = vsel %vm398, %v395, %v397
        %v401 = vrot.slane %v308, 6
        %vm402 = vcmask 1041408
        %v403 = vsel %vm402, %v314, %v325
        %vm404 = vcmask 1043456
        %v405 = vsel %vm404, %v403, %v334
        %vm406 = vcmask 1045504
        %v407 = vsel %vm406, %v405, %v343
        %v408 = vsel %vm402, %v350, %v357
        %v409 = vsel %vm404, %v408, %v364
        %v410 = vsel %vm406, %v409, %v371
        %v411 = vsel %vm402, %v378, %v385
        %v412 = vsel %vm404, %v411, %v392
        %v413 = vsel %vm406, %v412, %v399
        %v414 = vld [vmem:[%s3] sm:$0xff]
        %v415 = vld [vmem:[%s4] sm:$0xff]
        %417 = vset.pattern.permute.xlu0 0
        %418 = vperm.xlu0 %417, %v415
        %v419 = vpop.permute.xlu0 %418
        %vm421 = vcmask 211968
        %v423 = vsel %vm421, %v414, 0
        %v425 = vsel %vm402, %v401, 0
        %427 = vmatprep.subr.mxu0 0.0
        %428 = vmatpush1.msra.mxu0 0.0
        %429 = vmatprep.subr.mxu0 0.0
        %430 = vmatpush1.msra.mxu0 0.0
        %431 = vmatprep.subr.mxu0 0.0
        %432 = vmatpush1.msra.mxu0 0.0
        %433 = vmatprep.subr.mxu0 0.0
        %434 = vmatpush1.msra.mxu0 0.0
        %435 = vmatprep.subr.mxu0 0.0
        %436 = vmatpush1.msra.mxu0 0.0
        %437 = vmatprep.subr.mxu0 0.0
        %438 = vmatpush1.msra.mxu0 0.0
        %439 = vmatprep.subr.mxu0 0.0
        %440 = vmatpush1.msra.mxu0 0.0
        %441 = vmatprep.subr.mxu0 0.0
        %442 = vmatpush1.msra.mxu0 0.0
        %443 = vmatprep.subr.mxu0 0.0
        %444 = vmatpush1.msra.mxu0 0.0
        %445 = vmatprep.subr.mxu0 0.0
        %446 = vmatpush1.msra.mxu0 0.0
        %447 = vmatprep.subr.mxu0 0.0
        %448 = vmatpush1.msra.mxu0 0.0
        %449 = vmatprep.subr.mxu0 0.0
        %450 = vmatpush1.msra.mxu0 0.0
        %451 = vmatprep.subr.mxu0 0.0
        %452 = vmatpush1.msra.mxu0 %v425
        %453 = vmatprep.subr.mxu0 0.0
        %454 = vmatpush1.msra.mxu0 %v413
        %455 = vmatprep.subr.mxu0 0.0
        %456 = vmatpush1.msra.mxu0 %v410
        %457 = vmatprep.subr.mxu0 0.0
        %458 = vmatpush1.msra.mxu0 %v407
        %459 = vmatprep.subr.mxu0 0.0
        %460 = vmatpush2.msra.mxu0 0.0
        %461 = vmatprep.subr.mxu0 0.0
        %462 = vmatpush2.msra.mxu0 0.0
        %463 = vmatprep.subr.mxu0 0.0
        %464 = vmatpush2.msra.mxu0 0.0
        %465 = vmatprep.subr.mxu0 0.0
        %466 = vmatpush2.msra.mxu0 0.0
        %467 = vmatprep.subr.mxu0 0.0
        %468 = vmatpush2.msra.mxu0 0.0
        %469 = vmatprep.subr.mxu0 0.0
        %470 = vmatpush2.msra.mxu0 0.0
        %471 = vmatprep.subr.mxu0 0.0
        %472 = vmatpush2.msra.mxu0 0.0
        %473 = vmatprep.subr.mxu0 0.0
        %474 = vmatpush2.msra.mxu0 0.0
        %475 = vmatprep.subr.mxu0 0.0
        %476 = vmatpush2.msra.mxu0 0.0
        %477 = vmatprep.subr.mxu0 0.0
        %478 = vmatpush2.msra.mxu0 0.0
        %479 = vmatprep.subr.mxu0 0.0
        %480 = vmatpush2.msra.mxu0 0.0
        %481 = vmatprep.subr.mxu0 0.0
        %482 = vmatpush2.msra.mxu0 0.0
        %483 = vmatprep.subr.mxu0 0.0
        %484 = vmatpush2.msra.mxu0 0.0
        %485 = vmatprep.subr.mxu0 0.0
        %486 = vmatpush2.msra.mxu0 0.0
        %487 = vmatprep.subr.mxu0 0.0
        %488 = vmatpush2.msra.mxu0 0.0
        %489 = vmatprep.subr.mxu0 0.0
        %490 = vmatpush2.msra.mxu0 0.0
        %491 = vmatprep.mubr.f32.mxu0 0.0
        %492 = vmatmul.mubr.f32.gmra.mxu0 %v423
        %v493 = vpop.f32.mrf.mxu0
        %v494 = vadd.f32 %v419, %v493
        %v495 = vpop.f32.mrf.mxu0
        %496 = vdwg.mxu0
        %v497 = vadd.f32 %v494, %v220
        %vm498 = vcmp.ge.f32.partialorder %v497, 0.0
        %v499 = vmul.f32 %v497, 0.2
        %v500 = vsel %vm498, %v497, %v499
        %501 = vst [vmem:[%s215] sm:$0xff] %v500
        %s502 = sand.u32 %s137, 1
        %s503 = scalar_lea.sflag [#allocation3], %s502
        %s504 = sand.u32 %s137, 1
        %s505 = smul.addr %s504, 8
        %s506 = scalar_lea.vmem [#allocation2], %s505
        // Predicated region
        $region41: #{decoder_block_forward.3} parent=39 // pred_check
          %p507 = pneg %p147
        $region42: #{decoder_block_forward.3} parent=39 // pred_check_branch
          %509 = sbr.rel (%p507) target = $region44
        $region43: #{decoder_block_forward.3} parent=39 // pred_region
          %s511 = ssub.s32 128, 128
          %512 = vsyncadd %s503, %s511
          %s513 = smul.addr %s19, 128
          %s514 = scalar_lea.hbm %s5, %s513
          %s516 = sshll.u32 %s506, 4
          %s517 = int_to_ptr.vmem [resolvable:$true] %s516
          %519 = dma.vmem_to_hbm [thread:$0]  %s517, 128, %s514, %s503
        $region44: #{decoder_block_forward.3} parent=39 // pred_fallthru
          _
      $region40: #{decoder_block_forward.3} parent=5 // pred_fallthru
        _
      %p520 = scmp.le.s32.totalorder 2, %s14
      // Predicated region
      $region45: #{decoder_block_forward.3} parent=5 // pred_check
        %p521 = pneg %p520
      $region46: #{decoder_block_forward.3} parent=5 // pred_check_branch
        %523 = sbr.rel (%p521) target = $region48
      $region47: #{decoder_block_forward.3} parent=5 // pred_region
        %s524 = ssub.s32 %s14, 2
        // Predicated region
        $region49: #{decoder_block_forward.3} parent=47 // pred_check
          %p525 = pneg %p153
        $region50: #{decoder_block_forward.3} parent=47 // pred_check_branch
          %527 = sbr.rel (%p525) target = $region52
        $region51: #{decoder_block_forward.3} parent=47 // pred_region
          %s528 = sand.u32 %s138, 1
          %s529 = scalar_lea.sflag [#allocation3], %s528
          %s530 = sand.u32 %s138, 1
          %s531 = smul.addr %s530, 8
          %s532 = scalar_lea.vmem [#allocation2], %s531
          %533 = dma.done %s529, 128
        $region52: #{decoder_block_forward.3} parent=47 // pred_fallthru
          _
      $region48: #{decoder_block_forward.3} parent=5 // pred_fallthru
        _
    $region6: #{decoder_block_forward.3} parent=1 // loop_footer
      %s18 = sadd.s32 1, %s14
    $region7: #{decoder_block_forward.3} parent=1 // loop_footer_branch
      %13 = sbr.rel target = $region3
    $region8: #{decoder_block_forward.3} parent=1 // loop_exit
      _
    %534 = vsyncpa [#allocation3], 1
    %s535 = scalar_lea.sflag [#allocation3], 1
    %536 = vsyncpa %s535, 1

</llo_original>
